<compile_context>
chip_gen: v7x
topology: tpu7x:2x2x1
jax: 0.10.0
libtpu: 0.0.40
codegen_flags: <defaults>
</compile_context>

<pallas_src>
import jax
import jax.numpy as jnp
from jax import lax
from jax.experimental import pallas as pl
from jax.experimental.pallas import tpu as pltpu


def _round_up(x, m):
    return ((x + m - 1) // m) * m


def _largest_dividing_tile(n, candidates):
    for c in candidates:
        if n % c == 0:
            return c
    return n


def attn_mask_kernel(lengths_ref, mask_ref):
    # lengths_ref: SMEM int32[B]      (scalar-prefetched)
    # mask_ref:    VMEM f32[TR, TC]   (one (row-tile, col-tile) of one batch elem)
    b = pl.program_id(0)
    r = pl.program_id(1)
    c = pl.program_id(2)
    L = lengths_ref[b]

    tr, tc = mask_ref.shape
    row0 = r * tr
    col0 = c * tc

    # attn_mask[b, i, j] = 1.0 iff (i < L) and (j < L)
    # Outer product of two 1-D compares; no full-tile 2-D iota materialization.
    row_ok = (lax.broadcasted_iota(jnp.int32, (tr, 1), 0) + row0) < L
    col_ok = (lax.broadcasted_iota(jnp.int32, (1, tc), 1) + col0) < L
    mask_ref[...] = jnp.logical_and(row_ok, col_ok).astype(mask_ref.dtype)


def subgraph_forward(input_list, d_model=None, mask_dtype=jnp.float32):
    """input_list: python list of [n_i, d_model] float32 arrays."""
    batch = len(input_list)
    if d_model is None:
        d_model = int(input_list[0].shape[1])
    assert all(int(x.shape[1]) == d_model for x in input_list), "d_model mismatch"

    lens = [int(x.shape[0]) for x in input_list]
    assert all(n > 0 for n in lens)
    lengths = jnp.asarray(lens, dtype=jnp.int32)
    max_n = max(lens)

    # merge_tensors: this IS the zero-padded [B, max_n, d_model] slab; no
    # kernel pass-through needed (kernel no longer reads/rewrites it).
    input_states = jnp.stack(
        [jnp.pad(x, ((0, max_n - x.shape[0]), (0, 0))) for x in input_list], axis=0
    ).astype(jnp.float32)

    # Lane-dense mask output: pad node dim up to a multiple of 128.
    n_pad = _round_up(max_n, 128)
    tc = _largest_dividing_tile(n_pad, (512, 256, 128))   # lane tile (mult of 128)
    tr = _largest_dividing_tile(n_pad, (256, 128, 8))     # sublane tile (mult of 8)
    grid = (batch, n_pad // tr, n_pad // tc)

    grid_spec = pltpu.PrefetchScalarGridSpec(
        num_scalar_prefetch=1,          # lengths -> SMEM
        grid=grid,
        in_specs=[],                    # no tensor inputs: pure mask writer
        out_specs=pl.BlockSpec((None, tr, tc), lambda b, r, c, lens_ref: (b, r, c)),
    )

    mask_bytes = batch * n_pad * n_pad * jnp.dtype(mask_dtype).itemsize
    cost = pl.CostEstimate(
        flops=batch * n_pad * n_pad,    # compares / and / cast
        transcendentals=0,
        bytes_accessed=mask_bytes + batch * 4,
    )

    mask_padded = pl.pallas_call(
        attn_mask_kernel,
        out_shape=jax.ShapeDtypeStruct((batch, n_pad, n_pad), mask_dtype),
        grid_spec=grid_spec,
        compiler_params=pltpu.CompilerParams(
            dimension_semantics=("parallel", "parallel", "parallel")
        ),
        cost_estimate=cost,
    )(lengths)

    # Exact [B, max_n, max_n] view (padding region is already all-zero).
    attn_mask = mask_padded if n_pad == max_n else mask_padded[:, :max_n, :max_n]
    return input_states, attn_mask, lengths


if __name__ == "__main__":
    key = jax.random.PRNGKey(0)
    d_model = 32            # cfg.MODEL.hidden_size
    lens = [5, 8]           # batch of 2 variable-length polylines
    input_list = []
    for n in lens:
        key, sub = jax.random.split(key)
        input_list.append(jax.random.normal(sub, (n, d_model), dtype=jnp.float32))

    states, mask, lengths = subgraph_forward(input_list, d_model)
    jax.block_until_ready((states, mask))

    # reference check (pure JAX / numpy semantics of the PyTorch forward)
    max_n = max(lens)
    ref_states = jnp.stack(
        [jnp.pad(x, ((0, max_n - x.shape[0]), (0, 0))) for x in input_list], axis=0
    )
    ref_mask = jnp.stack(
        [
            (
                (jnp.arange(max_n)[:, None] < n) & (jnp.arange(max_n)[None, :] < n)
            ).astype(jnp.float32)
            for n in lens
        ],
        axis=0,
    )
    assert jnp.allclose(states, ref_states), "input_states mismatch"
    assert jnp.allclose(mask, ref_mask), "attn_mask mismatch"
    assert states.shape == (2, max_n, d_model)
    assert mask.shape == (2, max_n, max_n)

    print("KERNEL_OK")
</pallas_src>

<mosaic_0001>
module attributes {stable_mosaic.version = 11 : i64} {
  func.func @attn_mask_kernel(%arg0: i32, %arg1: i32, %arg2: i32, %arg3: memref<2xi32, #tpu.memory_space<smem>>, %arg4: memref<1x128x128xf32, #tpu.memory_space<vmem>>) attributes {dimension_semantics = [#tpu.dimension_semantics<parallel>, #tpu.dimension_semantics<parallel>, #tpu.dimension_semantics<parallel>], iteration_bounds = array<i64: 2, 1, 1>, scalar_prefetch = 1 : i64, scratch_operands = 0 : i64, tpu.core_type = #tpu.core_type<tc>, window_params = [{transform_indices = @transform_0, window_bounds = array<i64: 1, 128, 128>}]} {
    %0 = arith.index_cast %arg0 : i32 to index
    %1 = memref.load %arg3[%0] : memref<2xi32, #tpu.memory_space<smem>>
    %c128_i32 = arith.constant 128 : i32
    %2 = arith.muli %arg1, %c128_i32 : i32
    %c128_i32_0 = arith.constant 128 : i32
    %3 = arith.muli %arg2, %c128_i32_0 : i32
    %4 = tpu.iota {dimensions = array<i32: 0>} : vector<128x1xi32>
    %5 = vector.broadcast %2 : i32 to vector<128x1xi32>
    %6 = arith.addi %4, %5 : vector<128x1xi32>
    %7 = vector.broadcast %1 : i32 to vector<128x1xi32>
    %8 = arith.cmpi slt, %6, %7 : vector<128x1xi32>
    %9 = tpu.iota {dimensions = array<i32: 1>} : vector<1x128xi32>
    %10 = vector.broadcast %3 : i32 to vector<1x128xi32>
    %11 = arith.addi %9, %10 : vector<1x128xi32>
    %12 = vector.broadcast %1 : i32 to vector<1x128xi32>
    %13 = arith.cmpi slt, %11, %12 : vector<1x128xi32>
    %14 = vector.broadcast %8 : vector<128x1xi1> to vector<128x128xi1>
    %15 = vector.broadcast %13 : vector<1x128xi1> to vector<128x128xi1>
    %16 = arith.andi %14, %15 : vector<128x128xi1>
    %17 = arith.extui %16 : vector<128x128xi1> to vector<128x128xi32>
    %18 = arith.sitofp %17 : vector<128x128xi32> to vector<128x128xf32>
    %c0 = arith.constant 0 : index
    %c0_1 = arith.constant 0 : index
    %c0_2 = arith.constant 0 : index
    %19 = vector.load %arg4[%c0, %c0_1, %c0_2] : memref<1x128x128xf32, #tpu.memory_space<vmem>>, vector<1x128x128xf32>
    %20 = vector.shape_cast %19 : vector<1x128x128xf32> to vector<128x128xf32>
    %21 = vector.shape_cast %18 : vector<128x128xf32> to vector<1x128x128xf32>
    tpu.vector_store %arg4[%c0, %c0_1, %c0_2], %21 {strides = array<i32>} : memref<1x128x128xf32, #tpu.memory_space<vmem>>, vector<1x128x128xf32>,
    return
  }
  func.func @transform_0(%arg0: i32, %arg1: i32, %arg2: i32, %arg3: memref<2xi32, #tpu.memory_space<smem>>) -> (i32, i32, i32) {
    %c0_i32 = arith.constant 0 : i32
    return %arg0, %arg1, %arg2 : i32, i32, i32
  }
}

</mosaic_0001>

<llo_original>
// kernel: tpu_custom_call.1
$region0: #{tpu_custom_call.1}
  #allocation0 [shape = 'u32[]', space=smem, size = 0x4, offset = 0x4, fixed_abs, tag = 'smem constant byte address 0x4 - core index']
  #allocation1 [shape = 'u32[144,128]{1,0:T(1,128)}', space=vmem, size = 0x12000, scoped, tag = 'internal scratch']
  #allocation2 [shape = 's32[1]{0}', space=sflag, size = 0x4, scoped, tag = 'scoped memory for tpu_custom_call.1']
  #allocation3 [shape = 'u8[512]{0}', space=smem, size = 0x200, scoped, tag = 'prefetched SMEM operand 0']
  %s0 = inlined_call_operand.hbm [shape: s32[2], index: 0, kind: input, shape index: {}]
  %s1 = inlined_call_operand.hbm [shape: f32[2,128,128], index: 1, kind: output, shape index: {}]
  %s2 = sld [smem:[#allocation0]]
  $region25: #{tpu_custom_call.1} parent=0
    _
  %s4 = ssub.s32 1, %s2
  %s5 = scalar_select 0, %s4, %s2
  %7 = dma.hbm_to_smem %s0, 16, [#allocation3], [#allocation2]
  %8 = dma.done [#allocation2], 16
  %9 = sfence
  $region1: #{tpu_custom_call.1} parent=0
    #allocation4 [shape = 'u8[131072]{0}', space=vmem, size = 0x20000, scoped, tag = 'output window, operand 0']
    #allocation5 [shape = 's32[2]{0}', space=sflag, size = 0x8, scoped, tag = 'scoped memory for tpu_custom_call.1']
    %10 = vsyncpa [#allocation5], 0
    %s11 = scalar_lea.sflag [#allocation5], 1
    %12 = vsyncpa %s11, 0
    loop: start=0, step=1, limit=3
    $region2: #{tpu_custom_call.1} parent=1 // loop_pre_header
      _
    $region3: #{tpu_custom_call.1} parent=1 // loop_header
      %s14 = sphi 0, %s18
      %p15 = scmp.ge.s32.totalorder %s14, 3
      %s20 = sphi 0, %s36
      %s21 = sphi 0, %s32
      %s22 = sphi 0, %s28
      %s23 = sphi 0, %s20
      %s24 = sphi 0, %s21
      %s25 = sphi 0, %s22
      %s43 = sphi 0, %s45
      %s46 = sphi 0, %s43
      %s56 = sphi 0, %s46
    $region4: #{tpu_custom_call.1} parent=1 // loop_header_branch
      %17 = sbr.rel (%p15) target = $region8
    $region5: #{tpu_custom_call.1} parent=1 // loop_body
      %s19 = ssub.s32 %s14, 1
      %s26 = sadd.s32 1, %s22
      %p27 = scmp.ge.s32.totalorder %s26, 1
      %s28 = scalar_select %p27, 0, %s26
      %s29 = sadd.s32 1, %s21
      %s30 = scalar_select %p27, %s29, %s21
      %p31 = scmp.ge.s32.totalorder %s30, 1
      %s32 = scalar_select %p31, 0, %s30
      %s33 = sadd.s32 1, %s20
      %s34 = scalar_select %p31, %s33, %s20
      %p35 = scmp.ge.s32.totalorder %s34, 2
      %s36 = scalar_select %p35, 0, %s34
      %s37 = ssub.s32 %s20, %s36
      %s38 = ssub.s32 %s21, %s32
      %s39 = sor.u32 %s37, %s38
      %s40 = ssub.s32 %s22, %s28
      %s41 = sor.u32 %s39, %s40
      %p42 = scmp.eq.s32.totalorder %s41, 0
      %s44 = sadd.s32 %s43, 1
      %s45 = scalar_select %p42, %s43, %s44
      %p47 = pneg %p42
      %p48 = scmp.eq.s32.totalorder %s14, 1
      %p49 = por %p47, %p48
      %p50 = scmp.ne.s32.totalorder %s43, %s46
      %p51 = scmp.eq.s32.totalorder %s14, 0
      %p52 = por %p50, %p51
      %p53 = scmp.ne.s32.totalorder %s43, %s46
      %p54 = scmp.eq.s32.totalorder %s19, 1
      %p55 = por %p53, %p54
      %p57 = scmp.ne.s32.totalorder %s46, %s56
      %p58 = scmp.eq.s32.totalorder %s19, 0
      %p59 = por %p57, %p58
      %p60 = scmp.lt.s32.totalorder %s14, 2
      // Predicated region
      $region9: #{tpu_custom_call.1} parent=5 // pred_check
        %p61 = pneg %p60
      $region10: #{tpu_custom_call.1} parent=5 // pred_check_branch
        %63 = sbr.rel (%p61) target = $region12
      $region11: #{tpu_custom_call.1} parent=5 // pred_region
        %p64 = pneg %p52
        %p65 = pneg %p49
        %s66 = sand.u32 %s43, 1
        %s67 = scalar_lea.sflag [#allocation5], %s66
        %s68 = sand.u32 %s43, 1
        %s69 = smul.addr %s68, 128
        %s70 = scalar_lea.vmem [#allocation4], %s69
        %s71 = smul.u32 16, %s21
        %s72 = sld [smem:[#allocation3 + %s20]]
        %s73 = smul.u32 %s21, 128
        %s74 = smul.u32 %s22, 128
        %v75 = vlaneseq
        %v76 = vshrl.u32 %v75, 7
        %v77 = vadd.s32 %v76, 8
        %v78 = vadd.s32 %v76, 16
        %v79 = vadd.s32 %v76, 24
        %v80 = vadd.s32 %v76, 32
        %v81 = vadd.s32 %v76, 40
        %v82 = vadd.s32 %v76, 48
        %v83 = vadd.s32 %v76, 56
        %v84 = vadd.s32 %v76, 64
        %v85 = vadd.s32 %v76, 72
        %v86 = vadd.s32 %v76, 80
        %v87 = vadd.s32 %v76, 88
        %v88 = vadd.s32 %v76, 96
        %v89 = vadd.s32 %v76, 104
        %v90 = vadd.s32 %v76, 112
        %v91 = vadd.s32 %v76, 120
        %v92 = vstv %s73
        %v93 = vadd.s32 %v76, %v92
        %v94 = vadd.s32 %v77, %v92
        %v95 = vadd.s32 %v78, %v92
        %v96 = vadd.s32 %v79, %v92
        %v97 = vadd.s32 %v80, %v92
        %v98 = vadd.s32 %v81, %v92
        %v99 = vadd.s32 %v82, %v92
        %v100 = vadd.s32 %v83, %v92
        %v101 = vadd.s32 %v84, %v92
        %v102 = vadd.s32 %v85, %v92
        %v103 = vadd.s32 %v86, %v92
        %v104 = vadd.s32 %v87, %v92
        %v105 = vadd.s32 %v88, %v92
        %v106 = vadd.s32 %v89, %v92
        %v107 = vadd.s32 %v90, %v92
        %v108 = vadd.s32 %v91, %v92
        %v109 = vstv %s72
        %vm110 = vcmp.lt.s32.totalorder %v93, %v109
        %vm111 = vcmp.lt.s32.totalorder %v94, %v109
        %vm112 = vcmp.lt.s32.totalorder %v95, %v109
        %vm113 = vcmp.lt.s32.totalorder %v96, %v109
        %vm114 = vcmp.lt.s32.totalorder %v97, %v109
        %vm115 = vcmp.lt.s32.totalorder %v98, %v109
        %vm116 = vcmp.lt.s32.totalorder %v99, %v109
        %vm117 = vcmp.lt.s32.totalorder %v100, %v109
        %vm118 = vcmp.lt.s32.totalorder %v101, %v109
        %vm119 = vcmp.lt.s32.totalorder %v102, %v109
        %vm120 = vcmp.lt.s32.totalorder %v103, %v109
        %vm121 = vcmp.lt.s32.totalorder %v104, %v109
        %vm122 = vcmp.lt.s32.totalorder %v105, %v109
        %vm123 = vcmp.lt.s32.totalorder %v106, %v109
        %vm124 = vcmp.lt.s32.totalorder %v107, %v109
        %vm125 = vcmp.lt.s32.totalorder %v108, %v109
        %v126 = vlaneseq
        %v127 = vand.u32 %v126, 127
        %v128 = vstv %s74
        %v129 = vadd.s32 %v127, %v128
        %vm130 = vcmp.lt.s32.totalorder %v129, %v109
        %v131 = vsel %vm110, 1, 0
        %v132 = vsel %vm111, 1, 0
        %v133 = vsel %vm112, 1, 0
        %v134 = vsel %vm113, 1, 0
        %v135 = vsel %vm114, 1, 0
        %v136 = vsel %vm115, 1, 0
        %v137 = vsel %vm116, 1, 0
        %v138 = vsel %vm117, 1, 0
        %v139 = vsel %vm118, 1, 0
        %v140 = vsel %vm119, 1, 0
        %v141 = vsel %vm120, 1, 0
        %v142 = vsel %vm121, 1, 0
        %v143 = vsel %vm122, 1, 0
        %v144 = vsel %vm123, 1, 0
        %v145 = vsel %vm124, 1, 0
        %v146 = vsel %vm125, 1, 0
        %vm147 = vcmp.eq.s32.totalorder %v131, 1
        %vm148 = vcmp.eq.s32.totalorder %v132, 1
        %vm149 = vcmp.eq.s32.totalorder %v133, 1
        %vm150 = vcmp.eq.s32.totalorder %v134, 1
        %vm151 = vcmp.eq.s32.totalorder %v135, 1
        %vm152 = vcmp.eq.s32.totalorder %v136, 1
        %vm153 = vcmp.eq.s32.totalorder %v137, 1
        %vm154 = vcmp.eq.s32.totalorder %v138, 1
        %vm155 = vcmp.eq.s32.totalorder %v139, 1
        %vm156 = vcmp.eq.s32.totalorder %v140, 1
        %vm157 = vcmp.eq.s32.totalorder %v141, 1
        %vm158 = vcmp.eq.s32.totalorder %v142, 1
        %vm159 = vcmp.eq.s32.totalorder %v143, 1
        %vm160 = vcmp.eq.s32.totalorder %v144, 1
        %vm161 = vcmp.eq.s32.totalorder %v145, 1
        %vm162 = vcmp.eq.s32.totalorder %v146, 1
        %v163 = vsel %vm130, 1, 0
        %vm164 = vcmp.eq.s32.totalorder %v163, 1
        %vm165 = vmand %vm147, %vm164
        %vm166 = vmand %vm148, %vm164
        %vm167 = vmand %vm149, %vm164
        %vm168 = vmand %vm150, %vm164
        %vm169 = vmand %vm151, %vm164
        %vm170 = vmand %vm152, %vm164
        %vm171 = vmand %vm153, %vm164
        %vm172 = vmand %vm154, %vm164
        %vm173 = vmand %vm155, %vm164
        %vm174 = vmand %vm156, %vm164
        %vm175 = vmand %vm157, %vm164
        %vm176 = vmand %vm158, %vm164
        %vm177 = vmand %vm159, %vm164
        %vm178 = vmand %vm160, %vm164
        %vm179 = vmand %vm161, %vm164
        %vm180 = vmand %vm162, %vm164
        %v181 = vsel %vm165, 1, 0
        %v182 = vsel %vm166, 1, 0
        %v183 = vsel %vm167, 1, 0
        %v184 = vsel %vm168, 1, 0
        %v185 = vsel %vm169, 1, 0
        %v186 = vsel %vm170, 1, 0
        %v187 = vsel %vm171, 1, 0
        %v188 = vsel %vm172, 1, 0
        %v189 = vsel %vm173, 1, 0
        %v190 = vsel %vm174, 1, 0
        %v191 = vsel %vm175, 1, 0
        %v192 = vsel %vm176, 1, 0
        %v193 = vsel %vm177, 1, 0
        %v194 = vsel %vm178, 1, 0
        %v195 = vsel %vm179, 1, 0
        %v196 = vsel %vm180, 1, 0
        %v197 = vcvt.s32.f32 %v181
        %v198 = vcvt.s32.f32 %v182
        %v199 = vcvt.s32.f32 %v183
        %v200 = vcvt.s32.f32 %v184
        %v201 = vcvt.s32.f32 %v185
        %v202 = vcvt.s32.f32 %v186
        %v203 = vcvt.s32.f32 %v187
        %v204 = vcvt.s32.f32 %v188
        %v205 = vcvt.s32.f32 %v189
        %v206 = vcvt.s32.f32 %v190
        %v207 = vcvt.s32.f32 %v191
        %v208 = vcvt.s32.f32 %v192
        %v209 = vcvt.s32.f32 %v193
        %v210 = vcvt.s32.f32 %v194
        %v211 = vcvt.s32.f32 %v195
        %v212 = vcvt.s32.f32 %v196
        %213 = vst [vmem:[%s70] sm:$0xff] %v197
        %214 = vst [vmem:[%s70 + $0x8] sm:$0xff] %v198
        %215 = vst [vmem:[%s70 + $0x10] sm:$0xff] %v199
        %216 = vst [vmem:[%s70 + $0x18] sm:$0xff] %v200
        %217 = vst [vmem:[%s70 + $0x20] sm:$0xff] %v201
        %218 = vst [vmem:[%s70 + $0x28] sm:$0xff] %v202
        %219 = vst [vmem:[%s70 + $0x30] sm:$0xff] %v203
        %220 = vst [vmem:[%s70 + $0x38] sm:$0xff] %v204
        %221 = vst [vmem:[%s70 + $0x40] sm:$0xff] %v205
        %222 = vst [vmem:[%s70 + $0x48] sm:$0xff] %v206
        %223 = vst [vmem:[%s70 + $0x50] sm:$0xff] %v207
        %224 = vst [vmem:[%s70 + $0x58] sm:$0xff] %v208
        %225 = vst [vmem:[%s70 + $0x60] sm:$0xff] %v209
        %226 = vst [vmem:[%s70 + $0x68] sm:$0xff] %v210
        %227 = vst [vmem:[%s70 + $0x70] sm:$0xff] %v211
        %228 = vst [vmem:[%s70 + $0x78] sm:$0xff] %v212
        %s229 = sand.u32 %s43, 1
        %s230 = scalar_lea.sflag [#allocation5], %s229
        %s231 = sand.u32 %s43, 1
        %s232 = smul.addr %s231, 128
        %s233 = scalar_lea.vmem [#allocation4], %s232
        // Predicated region
        $region13: #{tpu_custom_call.1} parent=11 // pred_check
          %p234 = pneg %p49
        $region14: #{tpu_custom_call.1} parent=11 // pred_check_branch
          %236 = sbr.rel (%p234) target = $region16
        $region15: #{tpu_custom_call.1} parent=11 // pred_region
          %s237 = smul.u32 16, %s21
          %s239 = ssub.s32 2048, 2048
          %240 = vsyncadd %s230, %s239
          %s241 = sadd.s32 %s22, %s237
          %s242 = smul.addr %s20, 16
          %s243 = sadd.s32 %s241, %s242
          %s244 = smul.addr %s243, 128
          %s245 = scalar_lea.hbm %s1, %s244
          %s246 = sshll.u32 %s233, 4
          %s247 = int_to_ptr.vmem [resolvable:$true] %s246
          %252 = dma.vmem_to_hbm [thread:$0]  %s247, 2048, %s245, %s230, 128, 128, 8
        $region16: #{tpu_custom_call.1} parent=11 // pred_fallthru
          _
      $region12: #{tpu_custom_call.1} parent=5 // pred_fallthru
        _
      %p253 = scmp.le.s32.totalorder 1, %s14
      // Predicated region
      $region17: #{tpu_custom_call.1} parent=5 // pred_check
        %p254 = pneg %p253
      $region18: #{tpu_custom_call.1} parent=5 // pred_check_branch
        %256 = sbr.rel (%p254) target = $region20
      $region19: #{tpu_custom_call.1} parent=5 // pred_region
        %s257 = ssub.s32 %s14, 1
        // Predicated region
        $region21: #{tpu_custom_call.1} parent=19 // pred_check
          %p258 = pneg %p55
        $region22: #{tpu_custom_call.1} parent=19 // pred_check_branch
          %260 = sbr.rel (%p258) target = $region24
        $region23: #{tpu_custom_call.1} parent=19 // pred_region
          %s261 = sand.u32 %s46, 1
          %s262 = scalar_lea.sflag [#allocation5], %s261
          %s263 = sand.u32 %s46, 1
          %s264 = smul.addr %s263, 128
          %s265 = scalar_lea.vmem [#allocation4], %s264
          %266 = dma.done %s262, 2048
        $region24: #{tpu_custom_call.1} parent=19 // pred_fallthru
          _
      $region20: #{tpu_custom_call.1} parent=5 // pred_fallthru
        _
    $region6: #{tpu_custom_call.1} parent=1 // loop_footer
      %s18 = sadd.s32 1, %s14
    $region7: #{tpu_custom_call.1} parent=1 // loop_footer_branch
      %13 = sbr.rel target = $region3
    $region8: #{tpu_custom_call.1} parent=1 // loop_exit
      _
    %267 = vsyncpa [#allocation5], 1
    %s268 = scalar_lea.sflag [#allocation5], 1
    %269 = vsyncpa %s268, 1

</llo_original>
